<compile_context>
chip_gen: v7x
topology: tpu7x:2x2x1
jax: 0.10.0
libtpu: 0.0.40
codegen_flags: <defaults>
</compile_context>

<pallas_src>
import jax
import jax.numpy as jnp
from jax.experimental import pallas as pl


def identity_kernel(x_ref, o_ref):
    # Single full-tile load + store (elementwise identity).
    o_ref[...] = x_ref[...]


def _identity_copy(x2d):
    B, N = x2d.shape
    return pl.pallas_call(
        identity_kernel,
        out_shape=jax.ShapeDtypeStruct((B, N), x2d.dtype),
        # Full-array block (no grid): block shape equals the array shape, so the
        # (8, 128) divisibility constraint does not apply.
        in_specs=[pl.BlockSpec((B, N), lambda: (0, 0))],
        out_specs=pl.BlockSpec((B, N), lambda: (0, 0)),
        # Output reuses the input buffer (input is a jit-internal intermediate,
        # so donation is safe; the caller's x is untouched).
        input_output_aliases={0: 0},
    )(x2d)


@jax.jit
def cnn_actor_forward(x):
    """Pallas implementation of CNNActor.forward (identity), NCHW in/out."""
    B, C, H, W = x.shape
    # Lane-dense 2-D slab: last dim C*H*W = 1024 (multiple of 128). The reshapes are
    # metadata-only on a contiguous NCHW array.
    x2d = x.reshape(B, C * H * W)
    out2d = _identity_copy(x2d)
    return out2d.reshape(B, C, H, W)


if __name__ == "__main__":
    key = jax.random.PRNGKey(0)
    # Small NCHW input consistent with a CNN actor: batch=2, channels=4, 16x16 spatial.
    x = jax.random.normal(key, (2, 4, 16, 16), dtype=jnp.float32)

    y = cnn_actor_forward(x)
    jax.block_until_ready(y)

    assert y.shape == x.shape
    assert y.dtype == x.dtype
    assert jnp.array_equal(y, x)

    print("KERNEL_OK")
</pallas_src>

<mosaic_0001>
module attributes {stable_mosaic.version = 11 : i64} {
  func.func @identity_kernel(%arg0: memref<2x1024xf32, #tpu.memory_space<vmem>>, %arg1: memref<2x1024xf32, #tpu.memory_space<vmem>>) attributes {dimension_semantics = [], scalar_prefetch = 0 : i64, scratch_operands = 0 : i64, tpu.core_type = #tpu.core_type<tc>} {
    %c0 = arith.constant 0 : index
    %c0_0 = arith.constant 0 : index
    %0 = vector.load %arg0[%c0, %c0_0] : memref<2x1024xf32, #tpu.memory_space<vmem>>, vector<2x1024xf32>
    %c0_1 = arith.constant 0 : index
    %c0_2 = arith.constant 0 : index
    %1 = vector.load %arg1[%c0_1, %c0_2] : memref<2x1024xf32, #tpu.memory_space<vmem>>, vector<2x1024xf32>
    tpu.vector_store %arg1[%c0_1, %c0_2], %0 {strides = array<i32>} : memref<2x1024xf32, #tpu.memory_space<vmem>>, vector<2x1024xf32>,
    return
  }
}

</mosaic_0001>

<llo_original>
// kernel: cnn_actor_forward.1
$region0: #{cnn_actor_forward.1}
  #allocation0 [shape = 'u32[]', space=smem, size = 0x4, offset = 0x4, fixed_abs, tag = 'smem constant byte address 0x4 - core index']
  #allocation1 [shape = 'u32[144,128]{1,0:T(1,128)}', space=vmem, size = 0x12000, scoped, tag = 'internal scratch']
  %s0 = inlined_call_operand.vmem [shape: f32[2,1024], index: 0, kind: input, shape index: {}, may-alias: {0,1}]
  %s1 = inlined_call_operand.vmem [shape: f32[2,1024], index: 1, kind: output, shape index: {}, may-alias: {0,1}]
  %s2 = sld [smem:[#allocation0]]
  $region14: #{cnn_actor_forward.1} parent=0
    _
  %s4 = ssub.s32 1, %s2
  %s5 = scalar_select 0, %s4, %s2
  // Predicated region
  $region2: #{cnn_actor_forward.1} parent=0 // pred_check
    _
  $region3: #{cnn_actor_forward.1} parent=0 // pred_check_branch
    %7 = sbr.rel (0) target = $region5
  $region4: #{cnn_actor_forward.1} parent=0 // pred_region
    _
  $region5: #{cnn_actor_forward.1} parent=0 // pred_fallthru
    _
  %v8 = vld [vmem:[%s0] sm:$0xff]
  %v9 = vld [vmem:[%s0 + $0x8] sm:$0xff]
  %10 = vst [vmem:[%s1] sm:$0xff] %v8
  %11 = vst [vmem:[%s1 + $0x8] sm:$0xff] %v9
  // Predicated region
  $region6: #{cnn_actor_forward.1} parent=0 // pred_check
    _
  $region7: #{cnn_actor_forward.1} parent=0 // pred_check_branch
    %13 = sbr.rel (0) target = $region9
  $region8: #{cnn_actor_forward.1} parent=0 // pred_region
    _
  $region9: #{cnn_actor_forward.1} parent=0 // pred_fallthru
    _
  // Predicated region
  $region10: #{cnn_actor_forward.1} parent=0 // pred_check
    _
  $region11: #{cnn_actor_forward.1} parent=0 // pred_check_branch
    %15 = sbr.rel (0) target = $region13
  $region12: #{cnn_actor_forward.1} parent=0 // pred_region
    _
  $region13: #{cnn_actor_forward.1} parent=0 // pred_fallthru
    _

</llo_original>
